<compile_context>
chip_gen: v6e
topology: v6e:2x2x1
jax: 0.10.0
libtpu: 0.0.40
codegen_flags: <defaults>
</compile_context>

<pallas_src>
import functools

import jax
import jax.numpy as jnp
from jax import lax
from jax.experimental import pallas as pl
from jax.experimental.pallas import tpu as pltpu


def _vmem_budget_bytes():
    """~75% of per-core VMEM (96 MiB on v5e/v6e, 48 MiB on v7x); conservative fallback."""
    cap = 64 * 1024 * 1024  # safe lower bound if the query fails
    try:
        info = pltpu.get_tpu_info()
        cap = int(getattr(info, "vmem_capacity_bytes", cap) or cap)
    except Exception:
        pass
    return (3 * cap) // 4


def _pick_norm_tile(b, d, budget_bytes):
    """Row chunk for the normalization pre-pass (bounds f32 temporaries per step)."""
    fallback = None
    for tb in (256, 128, 64, 32, 16, 8):
        if b % tb != 0:
            continue
        fallback = tb
        # ~2 dbl-buffered f32 input blocks + bf16 out blocks + f32 temporaries.
        if 48 * tb * d <= budget_bytes:
            return tb
    return fallback if fallback is not None else b


def _pick_row_tile(n, d, budget_bytes):
    """Largest TM (multiple of 16, divides n=2B) whose per-step working set fits.

    Working set: resident bf16 zn copy (n*d*2) + (TM,n) int32 diag-mask scratch
    + ~5 live f32 (TM, n) slabs (sim, masked, exp, reduction temps) + the lhs slab.
    """
    resident = n * d * 2
    fallback = None
    for tm in (1024, 512, 256, 128, 64, 32, 16):  # no tm=8: below bf16 (16,128) packing
        if n % tm != 0:
            continue
        fallback = tm
        if resident + tm * (24 * n + 4 * d) <= budget_bytes:
            return tm
    return fallback if fallback is not None else 16


def _normalize_kernel(z1_ref, z2_ref, zn_ref, pos_ref, *, scale):
    """Normalize a (TB, D) row chunk of both views, fold sqrt(1/T), emit bf16.

    Also accumulates sum_i <zn1_i, zn2_i> / T (the positive similarities) so the
    alignment term never touches the (2B, 2B) matrix.
    """
    @pl.when(pl.program_id(0) == 0)
    def _init():
        pos_ref[...] = jnp.zeros_like(pos_ref)

    s = jnp.float32(scale)
    z1 = z1_ref[...].astype(jnp.float32)
    z2 = z2_ref[...].astype(jnp.float32)
    # rsqrt(max(ss, 1e-16)) == 1 / max(||z||, 1e-8): matches the torch eps clamp.
    zn1 = z1 * (lax.rsqrt(jnp.maximum(jnp.sum(z1 * z1, axis=-1, keepdims=True), 1e-16)) * s)
    zn2 = z2 * (lax.rsqrt(jnp.maximum(jnp.sum(z2 * z2, axis=-1, keepdims=True), 1e-16)) * s)
    zn_ref[0] = zn1.astype(jnp.bfloat16)
    zn_ref[1] = zn2.astype(jnp.bfloat16)
    # sqrt(1/T) is folded into both operands, so this is already <zn1, zn2> / T.
    pos_ref[...] += jnp.sum(zn1 * zn2)


def _ntxent_dist_kernel(zn_hbm_ref, out_ref, zn_vmem, colrow_ref, acc_ref, copy_sem,
                        *, tm, n):
    i = pl.program_id(1)
    inner = pl.num_programs(1)

    @pl.when(i == 0)
    def _init():
        # One DMA of the normalized bf16 rows into a single resident VMEM copy.
        cp = pltpu.make_async_copy(zn_hbm_ref, zn_vmem, copy_sem)
        cp.start()
        # (col - row) indices computed once; the per-step diagonal mask becomes a
        # single compare against the scalar row offset (no per-step iotas).
        colrow_ref[...] = (lax.broadcasted_iota(jnp.int32, (tm, n), 1)
                           - lax.broadcasted_iota(jnp.int32, (tm, n), 0))
        acc_ref[...] = jnp.zeros_like(acc_ref)
        cp.wait()

    row0 = pl.multiple_of((pl.program_id(0) * inner + i) * tm, tm)

    # (TM, 2B) similarity slab: bf16 operands, f32 accumulation, contraction over the
    # lane (D) dim of both operands.  Temperature is pre-folded -> no per-element scale.
    zn_blk = zn_vmem[pl.ds(row0, tm), :]
    sim = lax.dot_general(
        zn_blk,
        zn_vmem[...],
        dimension_numbers=(((1,), (1,)), ((), ())),
        preferred_element_type=jnp.float32,
    )

    # Mask the self-similarity diagonal, then a numerically stable row logsumexp.
    neg = jnp.where(colrow_ref[...] == row0, -jnp.inf, sim)
    m = jnp.max(neg, axis=-1, keepdims=True)
    lse = jnp.log(jnp.sum(jnp.exp(neg - m), axis=-1, keepdims=True)) + m

    # Accumulate in scratch; the output block is written exactly once per core.
    acc_ref[...] += jnp.sum(lse) * jnp.float32(1.0 / n)

    @pl.when(i == inner - 1)
    def _finalize():
        out_ref[...] = acc_ref[...]


def ntxent_loss(z_1, z_2, temperature=1.0):
    assert z_1.shape == z_2.shape and z_1.ndim == 2
    b, d = z_1.shape
    assert b % 8 == 0, "batch size must be a multiple of 8 for TPU sublane alignment"
    n = 2 * b

    # Lane-align the feature dim (zero padding changes neither norms nor dot products).
    dp = ((d + 127) // 128) * 128
    if dp != d:
        z_1 = jnp.pad(z_1, ((0, 0), (0, dp - d)))
        z_2 = jnp.pad(z_2, ((0, 0), (0, dp - d)))

    budget = _vmem_budget_bytes()
    scale = float(temperature) ** -0.5  # folded into both operands

    # ---- pass 1: normalize, fold temperature, alignment term --------------------
    tb = _pick_norm_tile(b, dp, budget)
    zn3, pos = pl.pallas_call(
        functools.partial(_normalize_kernel, scale=scale),
        out_shape=(jax.ShapeDtypeStruct((2, b, dp), jnp.bfloat16),
                   jax.ShapeDtypeStruct((1, 1), jnp.float32)),
        grid_spec=pltpu.PrefetchScalarGridSpec(
            num_scalar_prefetch=0,
            grid=(b // tb,),
            in_specs=[pl.BlockSpec((tb, dp), lambda i: (i, 0)),
                      pl.BlockSpec((tb, dp), lambda i: (i, 0))],
            out_specs=[pl.BlockSpec((2, tb, dp), lambda i: (0, i, 0)),
                       pl.BlockSpec((1, 1), lambda i: (0, 0))],
        ),
        compiler_params=pltpu.CompilerParams(
            dimension_semantics=("arbitrary",),  # pos is a resident accumulator
            vmem_limit_bytes=budget,
        ),
    )(z_1, z_2)
    zn = zn3.reshape(n, dp)  # contiguous (2, B, D) -> (2B, D): free relayout

    # ---- pass 2: masked row logsumexp over the (2B, 2B) similarities ------------
    tm = _pick_row_tile(n, dp, budget)
    steps = n // tm
    ncores = 2 if steps % 2 == 0 else 1  # 2-TC sharding on v7x; serial elsewhere
    inner = steps // ncores

    dist = pl.pallas_call(
        functools.partial(_ntxent_dist_kernel, tm=tm, n=n),
        out_shape=jax.ShapeDtypeStruct((ncores, 1), jnp.float32),
        grid_spec=pltpu.PrefetchScalarGridSpec(
            num_scalar_prefetch=0,
            grid=(ncores, inner),
            in_specs=[pl.BlockSpec(memory_space=pl.ANY)],  # zn stays in HBM; manual DMA
            out_specs=pl.BlockSpec((1, 1), lambda c, i: (c, 0)),
            scratch_shapes=[
                pltpu.VMEM((n, dp), jnp.bfloat16),  # resident normalized rows
                pltpu.VMEM((tm, n), jnp.int32),     # (col - row) diag-mask indices
                pltpu.VMEM((1, 1), jnp.float32),    # per-core loss accumulator
                pltpu.SemaphoreType.DMA,
            ],
        ),
        compiler_params=pltpu.CompilerParams(
            dimension_semantics=("parallel", "arbitrary"),
            vmem_limit_bytes=budget,
        ),
    )(zn)

    loss_distribution = jnp.sum(dist)              # sum of per-core partials
    loss_alignement = -pos[0, 0] / jnp.float32(b)  # each positive pair counted twice
    return loss_alignement + loss_distribution


def _ntxent_ref(z_1, z_2, temperature=1.0):
    # Pure-JAX reference mirroring the PyTorch module, for a sanity check.
    b = z_1.shape[0]
    z = jnp.concatenate([z_1, z_2], axis=0).astype(jnp.float32)
    zn = z / jnp.maximum(jnp.linalg.norm(z, axis=-1, keepdims=True), 1e-8)
    sim = (zn @ zn.T) / temperature
    n = 2 * b
    i = jnp.arange(b)
    positives = jnp.concatenate([sim[i, i + b], sim[i + b, i]], axis=0)
    eye = jnp.eye(n, dtype=bool)
    neg = jnp.where(eye, -jnp.inf, sim)
    loss_align = -jnp.mean(positives)
    loss_dist = jnp.mean(jax.scipy.special.logsumexp(neg, axis=1))
    return loss_align + loss_dist


if __name__ == "__main__":
    key = jax.random.PRNGKey(0)
    k1, k2 = jax.random.split(key)
    B, D = 8, 32  # small synthetic shapes: batch=8, hidden=32
    z_1 = jax.random.normal(k1, (B, D), dtype=jnp.float32)
    z_2 = jax.random.normal(k2, (B, D), dtype=jnp.float32)

    temperature = 1.0
    loss = ntxent_loss(z_1, z_2, temperature=temperature)
    loss = jax.block_until_ready(loss)

    ref = _ntxent_ref(z_1, z_2, temperature=temperature)
    # Tolerance loosened vs. the f32 reference because the similarity matmul uses
    # bf16 operands (f32 accumulation) on the MXU.
    assert jnp.allclose(loss, ref, rtol=2e-2, atol=2e-2), (loss, ref)

    print("KERNEL_OK")
</pallas_src>

<mosaic_0001>
module attributes {stable_mosaic.version = 11 : i64} {
  func.func @_normalize_kernel(%arg0: i32, %arg1: memref<8x128xf32, #tpu.memory_space<vmem>>, %arg2: memref<8x128xf32, #tpu.memory_space<vmem>>, %arg3: memref<2x8x128xbf16, #tpu.memory_space<vmem>>, %arg4: memref<1x1xf32, #tpu.memory_space<vmem>>) attributes {dimension_semantics = [#tpu.dimension_semantics<arbitrary>], iteration_bounds = array<i64: 1>, scalar_prefetch = 0 : i64, scratch_operands = 0 : i64, tpu.core_type = #tpu.core_type<tc>, window_params = [{transform_indices = @transform_0, window_bounds = array<i64: 8, 128>}, {transform_indices = @transform_1, window_bounds = array<i64: 8, 128>}, {transform_indices = @transform_2, window_bounds = array<i64: 2, 8, 128>}, {pipeline_mode = #tpu.pipeline_mode<synchronous>, transform_indices = @transform_3, window_bounds = array<i64: 1, 1>}]} {
    %c0_i32 = arith.constant 0 : i32
    %0 = arith.cmpi eq, %arg0, %c0_i32 : i32
    %1 = arith.extui %0 : i1 to i32
    %c0_i32_0 = arith.constant 0 : i32
    %2 = arith.cmpi ne, %1, %c0_i32_0 : i32
    scf.if %2 {
      %cst_19 = arith.constant 0.000000e+00 : f32
      %42 = vector.broadcast %cst_19 : f32 to vector<1x1xf32>
      %c0_20 = arith.constant 0 : index
      %c0_21 = arith.constant 0 : index
      %43 = vector.load %arg4[%c0_20, %c0_21] : memref<1x1xf32, #tpu.memory_space<vmem>>, vector<1x1xf32>
      tpu.vector_store %arg4[%c0_20, %c0_21], %42 {strides = array<i32>} : memref<1x1xf32, #tpu.memory_space<vmem>>, vector<1x1xf32>,
    } else {
    }
    %c0 = arith.constant 0 : index
    %c0_1 = arith.constant 0 : index
    %3 = vector.load %arg1[%c0, %c0_1] : memref<8x128xf32, #tpu.memory_space<vmem>>, vector<8x128xf32>
    %c0_2 = arith.constant 0 : index
    %c0_3 = arith.constant 0 : index
    %4 = vector.load %arg2[%c0_2, %c0_3] : memref<8x128xf32, #tpu.memory_space<vmem>>, vector<8x128xf32>
    %5 = arith.mulf %3, %3 : vector<8x128xf32>
    %cst = arith.constant dense<0.000000e+00> : vector<8xf32>
    %6 = vector.multi_reduction <add>, %5, %cst [1] : vector<8x128xf32> to vector<8xf32>
    %7 = vector.shape_cast %6 : vector<8xf32> to vector<8x1xf32>
    %cst_4 = arith.constant 1.000000e-16 : f32
    %8 = vector.broadcast %cst_4 : f32 to vector<8x1xf32>
    %9 = arith.maximumf %7, %8 : vector<8x1xf32>
    %10 = math.rsqrt %9 : vector<8x1xf32>
    %cst_5 = arith.constant 1.000000e+00 : f32
    %11 = vector.broadcast %cst_5 : f32 to vector<8x1xf32>
    %12 = arith.mulf %10, %11 : vector<8x1xf32>
    %13 = vector.broadcast %12 : vector<8x1xf32> to vector<8x128xf32>
    %14 = arith.mulf %3, %13 : vector<8x128xf32>
    %15 = arith.mulf %4, %4 : vector<8x128xf32>
    %cst_6 = arith.constant dense<0.000000e+00> : vector<8xf32>
    %16 = vector.multi_reduction <add>, %15, %cst_6 [1] : vector<8x128xf32> to vector<8xf32>
    %17 = vector.shape_cast %16 : vector<8xf32> to vector<8x1xf32>
    %cst_7 = arith.constant 1.000000e-16 : f32
    %18 = vector.broadcast %cst_7 : f32 to vector<8x1xf32>
    %19 = arith.maximumf %17, %18 : vector<8x1xf32>
    %20 = math.rsqrt %19 : vector<8x1xf32>
    %cst_8 = arith.constant 1.000000e+00 : f32
    %21 = vector.broadcast %cst_8 : f32 to vector<8x1xf32>
    %22 = arith.mulf %20, %21 : vector<8x1xf32>
    %23 = vector.broadcast %22 : vector<8x1xf32> to vector<8x128xf32>
    %24 = arith.mulf %4, %23 : vector<8x128xf32>
    %25 = arith.truncf %14 : vector<8x128xf32> to vector<8x128xbf16>
    %c0_9 = arith.constant 0 : index
    %c0_10 = arith.constant 0 : index
    %c0_11 = arith.constant 0 : index
    %26 = vector.load %arg3[%c0_9, %c0_10, %c0_11] : memref<2x8x128xbf16, #tpu.memory_space<vmem>>, vector<1x8x128xbf16>
    %27 = vector.shape_cast %26 : vector<1x8x128xbf16> to vector<8x128xbf16>
    %28 = vector.shape_cast %25 : vector<8x128xbf16> to vector<1x8x128xbf16>
    tpu.vector_store %arg3[%c0_9, %c0_10, %c0_11], %28 {strides = array<i32>} : memref<2x8x128xbf16, #tpu.memory_space<vmem>>, vector<1x8x128xbf16>,
    %29 = arith.truncf %24 : vector<8x128xf32> to vector<8x128xbf16>
    %c1 = arith.constant 1 : index
    %c0_12 = arith.constant 0 : index
    %c0_13 = arith.constant 0 : index
    %30 = vector.load %arg3[%c1, %c0_12, %c0_13] : memref<2x8x128xbf16, #tpu.memory_space<vmem>>, vector<1x8x128xbf16>
    %31 = vector.shape_cast %30 : vector<1x8x128xbf16> to vector<8x128xbf16>
    %32 = vector.shape_cast %29 : vector<8x128xbf16> to vector<1x8x128xbf16>
    tpu.vector_store %arg3[%c1, %c0_12, %c0_13], %32 {strides = array<i32>} : memref<2x8x128xbf16, #tpu.memory_space<vmem>>, vector<1x8x128xbf16>,
    %c0_14 = arith.constant 0 : index
    %c0_15 = arith.constant 0 : index
    %33 = vector.load %arg4[%c0_14, %c0_15] : memref<1x1xf32, #tpu.memory_space<vmem>>, vector<1x1xf32>
    %34 = arith.mulf %14, %24 : vector<8x128xf32>
    %35 = vector.shape_cast %34 : vector<8x128xf32> to vector<1x8x128xf32>
    %cst_16 = arith.constant dense<0.000000e+00> : vector<1xf32>
    %36 = vector.multi_reduction <add>, %35, %cst_16 [1, 2] : vector<1x8x128xf32> to vector<1xf32>
    %37 = vector.shape_cast %36 : vector<1xf32> to vector<1x1x1xf32>
    %38 = vector.extract %37[0, 0, 0] : f32 from vector<1x1x1xf32>
    %39 = vector.broadcast %38 : f32 to vector<1x1xf32>
    %40 = arith.addf %33, %39 : vector<1x1xf32>
    %c0_17 = arith.constant 0 : index
    %c0_18 = arith.constant 0 : index
    %41 = vector.load %arg4[%c0_17, %c0_18] : memref<1x1xf32, #tpu.memory_space<vmem>>, vector<1x1xf32>
    tpu.vector_store %arg4[%c0_17, %c0_18], %40 {strides = array<i32>} : memref<1x1xf32, #tpu.memory_space<vmem>>, vector<1x1xf32>,
    return
  }
  func.func @transform_0(%arg0: i32) -> (i32, i32) {
    %c0_i32 = arith.constant 0 : i32
    %c0_i32_0 = arith.constant 0 : i32
    return %arg0, %c0_i32 : i32, i32
  }
  func.func @transform_1(%arg0: i32) -> (i32, i32) {
    %c0_i32 = arith.constant 0 : i32
    %c0_i32_0 = arith.constant 0 : i32
    return %arg0, %c0_i32 : i32, i32
  }
  func.func @transform_2(%arg0: i32) -> (i32, i32, i32) {
    %c0_i32 = arith.constant 0 : i32
    %c0_i32_0 = arith.constant 0 : i32
    %c0_i32_1 = arith.constant 0 : i32
    return %c0_i32, %arg0, %c0_i32_0 : i32, i32, i32
  }
  func.func @transform_3(%arg0: i32) -> (i32, i32) {
    %c0_i32 = arith.constant 0 : i32
    %c0_i32_0 = arith.constant 0 : i32
    %c0_i32_1 = arith.constant 0 : i32
    return %c0_i32, %c0_i32_0 : i32, i32
  }
}

</mosaic_0001>

<llo_original>
// kernel: tpu_custom_call.1
$region0: #{tpu_custom_call.1}
  #allocation0 [shape = 'u32[]', space=smem, size = 0x4, offset = 0x4, fixed_abs, tag = 'smem constant byte address 0x4 - core index']
  #allocation1 [shape = 'u32[144,128]{1,0:T(1,128)}', space=vmem, size = 0x12000, scoped, tag = 'internal scratch']
  %s0 = inlined_call_operand.hbm [shape: f32[8,128], index: 0, kind: input, shape index: {}]
  %s1 = inlined_call_operand.hbm [shape: f32[8,128], index: 1, kind: input, shape index: {}]
  %s2 = inlined_call_operand.hbm [shape: bf16[2,8,128], index: 2, kind: output, shape index: {0}]
  %s3 = inlined_call_operand.hbm [shape: f32[1,1], index: 3, kind: output, shape index: {1}]
  %4 = xla_tuple %s2, %s3
  %s5 = sld [smem:[#allocation0]]
  $region38: #{tpu_custom_call.1} parent=0
    _
  %s7 = ssub.s32 1, %s5
  %s8 = scalar_select 0, %s7, %s5
  $region1: #{tpu_custom_call.1} parent=0
    #allocation2 [shape = 'u8[4096]{0}', space=vmem, size = 0x1000, scoped, tag = 'input window, operand 0, single buffered']
    #allocation3 [shape = 's32[1]{0}', space=sflag, size = 0x4, scoped, tag = 'scoped memory for tpu_custom_call.1']
    #allocation4 [shape = 's32[1]{0}', space=sflag, size = 0x4, scoped, tag = 'scoped memory for tpu_custom_call.1']
    #allocation5 [shape = 'u8[4096]{0}', space=vmem, size = 0x1000, scoped, tag = 'input window, operand 1, single buffered']
    #allocation6 [shape = 's32[1]{0}', space=sflag, size = 0x4, scoped, tag = 'scoped memory for tpu_custom_call.1']
    #allocation7 [shape = 'u8[4096]{0}', space=vmem, size = 0x1000, scoped, tag = 'output window, operand 0, single buffered']
    #allocation8 [shape = 'u8[512]{0}', space=vmem, size = 0x400, scoped, tag = 'output window, operand 1, single buffered']
    #allocation9 [shape = 's32[1]{0}', space=sflag, size = 0x4, scoped, tag = 'scoped memory for tpu_custom_call.1']
    %9 = vsyncpa [#allocation3], 0
    %10 = vsyncpa [#allocation6], 0
    %11 = vsyncpa [#allocation4], 0
    %12 = vsyncpa [#allocation9], 0
    // Predicated region
    $region2: #{tpu_custom_call.1} parent=1 // pred_check
      _
    $region3: #{tpu_custom_call.1} parent=1 // pred_check_branch
      %14 = sbr.rel (0) target = $region5
    $region4: #{tpu_custom_call.1} parent=1 // pred_region
      %s16 = ssub.s32 128, 128
      %17 = vsyncadd [#allocation3], %s16
      %s19 = sshll.u32 [#allocation2], 4
      %s20 = int_to_ptr.vmem [resolvable:$true] %s19
      %22 = dma.hbm_to_vmem [thread:$0]  %s0, 128, %s20, [#allocation3]
    $region5: #{tpu_custom_call.1} parent=1 // pred_fallthru
      _
    // Predicated region
    $region6: #{tpu_custom_call.1} parent=1 // pred_check
      _
    $region7: #{tpu_custom_call.1} parent=1 // pred_check_branch
      %24 = sbr.rel (0) target = $region9
    $region8: #{tpu_custom_call.1} parent=1 // pred_region
      %s26 = ssub.s32 128, 128
      %27 = vsyncadd [#allocation6], %s26
      %s29 = sshll.u32 [#allocation5], 4
      %s30 = int_to_ptr.vmem [resolvable:$true] %s29
      %32 = dma.hbm_to_vmem [thread:$0]  %s1, 128, %s30, [#allocation6]
    $region9: #{tpu_custom_call.1} parent=1 // pred_fallthru
      _
    // Predicated region
    $region10: #{tpu_custom_call.1} parent=1 // pred_check
      _
    $region11: #{tpu_custom_call.1} parent=1 // pred_check_branch
      %34 = sbr.rel (0) target = $region13
    $region12: #{tpu_custom_call.1} parent=1 // pred_region
      %35 = dma.done [#allocation3], 128
    $region13: #{tpu_custom_call.1} parent=1 // pred_fallthru
      _
    // Predicated region
    $region14: #{tpu_custom_call.1} parent=1 // pred_check
      _
    $region15: #{tpu_custom_call.1} parent=1 // pred_check_branch
      %37 = sbr.rel (0) target = $region17
    $region16: #{tpu_custom_call.1} parent=1 // pred_region
      %38 = dma.done [#allocation6], 128
    $region17: #{tpu_custom_call.1} parent=1 // pred_fallthru
      _
    %p39 = scmp.eq.s32.totalorder 0, 0
    // Predicated region
    $region18: #{tpu_custom_call.1} parent=1 // pred_check
      %p40 = pneg %p39
    $region19: #{tpu_custom_call.1} parent=1 // pred_check_branch
      %42 = sbr.rel (%p40) target = $region21
    $region20: #{tpu_custom_call.1} parent=1 // pred_region
      %vm43 = vcmask 0
      %44 = vst.msk [vmem:[#allocation8] sm:$0x1] %vm43, 0.0
    $region21: #{tpu_custom_call.1} parent=1 // pred_fallthru
      _
    %v45 = vld [vmem:[#allocation2] sm:$0xff]
    %v46 = vld [vmem:[#allocation5] sm:$0xff]
    %v47 = vmul.f32 %v45, %v45
    %48 = vadd.xlane.f32.xlu0 %v47
    %v49 = vpop.xlane.xlu0 %48
    %v50 = vmax.f32 %v49, 1e-16
    %v51 = vrsqrt.pop %v50
    %v52 = vmul.f32 %v45, %v51
    %v53 = vmul.f32 %v46, %v46
    %54 = vadd.xlane.f32.xlu0 %v53
    %v55 = vpop.xlane.xlu0 %54
    %v56 = vmax.f32 %v55, 1e-16
    %v57 = vrsqrt.pop %v56
    %v58 = vmul.f32 %v46, %v57
    %v59 = vpack.c.bf16 %v52, %v52
    %60 = vst [vmem:[#allocation7] sm:$0xf] %v59
    %v61 = vpack.c.bf16 %v58, %v58
    %s62 = scalar_lea.vmem [#allocation7], 4
    %63 = vst [vmem:[%s62] sm:$0xf] %v61
    %v64 = vld [vmem:[#allocation8] sm:$0x1]
    %v65 = vmul.f32 %v52, %v58
    %66 = vadd.xlane.f32.xlu0 %v65
    %v67 = vpop.xlane.xlu0 %66
    %v68 = vrot.slane %v67, 4
    %v69 = vadd.f32 %v67, %v68
    %v70 = vrot.slane %v69, 2
    %v71 = vadd.f32 %v69, %v70
    %v72 = vrot.slane %v71, 1
    %v73 = vadd.f32 %v71, %v72
    %s74 = vtos %v73
    %v75 = vstv %s74
    %v76 = vadd.f32 %v64, %v75
    %vm77 = vcmask 0
    %78 = vst.msk [vmem:[#allocation8] sm:$0x1] %vm77, %v76
    // Predicated region
    $region22: #{tpu_custom_call.1} parent=1 // pred_check
      _
    $region23: #{tpu_custom_call.1} parent=1 // pred_check_branch
      %80 = sbr.rel (0) target = $region25
    $region24: #{tpu_custom_call.1} parent=1 // pred_region
      %s82 = ssub.s32 128, 128
      %83 = vsyncadd [#allocation4], %s82
      %s84 = sshll.u32 [#allocation7], 4
      %s85 = int_to_ptr.vmem [resolvable:$true] %s84
      %90 = dma.vmem_to_hbm [thread:$0]  %s85, 128, %s2, [#allocation4], 64, 64, 4
    $region25: #{tpu_custom_call.1} parent=1 // pred_fallthru
      _
    // Predicated region
    $region26: #{tpu_custom_call.1} parent=1 // pred_check
      _
    $region27: #{tpu_custom_call.1} parent=1 // pred_check_branch
      %92 = sbr.rel (0) target = $region29
    $region28: #{tpu_custom_call.1} parent=1 // pred_region
      %s94 = ssub.s32 16, 16
      %95 = vsyncadd [#allocation9], %s94
      %s97 = sshll.u32 [#allocation8], 4
      %s98 = int_to_ptr.vmem [resolvable:$true] %s97
      %100 = dma.vmem_to_hbm [thread:$0]  %s98, 16, %s3, [#allocation9]
    $region29: #{tpu_custom_call.1} parent=1 // pred_fallthru
      _
    // Predicated region
    $region30: #{tpu_custom_call.1} parent=1 // pred_check
      _
    $region31: #{tpu_custom_call.1} parent=1 // pred_check_branch
      %102 = sbr.rel (0) target = $region33
    $region32: #{tpu_custom_call.1} parent=1 // pred_region
      %103 = dma.done [#allocation4], 128
    $region33: #{tpu_custom_call.1} parent=1 // pred_fallthru
      _
    // Predicated region
    $region34: #{tpu_custom_call.1} parent=1 // pred_check
      _
    $region35: #{tpu_custom_call.1} parent=1 // pred_check_branch
      %105 = sbr.rel (0) target = $region37
    $region36: #{tpu_custom_call.1} parent=1 // pred_region
      %106 = dma.done [#allocation9], 16
    $region37: #{tpu_custom_call.1} parent=1 // pred_fallthru
      _
    %107 = vsyncpa [#allocation3], 1
    %108 = vsyncpa [#allocation6], 1
    %109 = vsyncpa [#allocation4], 1
    %110 = vsyncpa [#allocation9], 1

</llo_original>
